<compile_context>
chip_gen: v7x
topology: tpu7x:2x2x1
jax: 0.10.0
libtpu: 0.0.40
codegen_flags: <defaults>
</compile_context>

<pallas_src>
import functools

import jax
import jax.numpy as jnp
from jax import lax
from jax.experimental import pallas as pl
from jax.experimental.pallas import tpu as pltpu


def _group_norm_kernel(x_ref, w_ref, b_ref, o_ref, *, eps, n_elems):
    # x_ref block: (1, 1, Cg, HW) — one group of one batch element.
    x = x_ref[...].astype(jnp.float32)

    # Two-pass mean / unbiased variance (torch.Tensor.var default divides by
    # n-1).  Two-pass avoids catastrophic cancellation of sum/sum-of-squares.
    mean = jnp.mean(x)
    diff = x - mean
    var = jnp.sum(diff * diff) * jnp.float32(1.0 / max(n_elems - 1, 1))

    # rsqrt lands on the EUP slot; fold affine into per-channel scale/offset
    # so the elementwise body is one FMA per element.
    inv_std = lax.rsqrt(var + jnp.float32(eps))
    w = w_ref[...].astype(jnp.float32)        # (1, 1, Cg, 1)
    b = b_ref[...].astype(jnp.float32)        # (1, 1, Cg, 1)
    scale = w * inv_std                       # (1, 1, Cg, 1)
    offset = b - mean * scale                 # (1, 1, Cg, 1)

    o_ref[...] = (x * scale + offset).astype(o_ref.dtype)


def group_norm_2d(x, weight, bias, num_groups, eps=1e-5):
    """GroupNorm2d forward. x: (N, C, H, W); weight/bias: (1, C, 1, 1)."""
    N, C, H, W = x.shape
    G = num_groups
    assert C % G == 0
    Cg = C // G
    HW = H * W

    # Lane-dense layout: collapse (H, W) -> HW so the last dim maps to lanes.
    x_r = x.reshape(N, G, Cg, HW)
    w_r = weight.reshape(1, G, Cg, 1)
    b_r = bias.reshape(1, G, Cg, 1)

    kernel = functools.partial(_group_norm_kernel, eps=eps, n_elems=Cg * HW)

    bytes_per_elem = x.dtype.itemsize
    cost = pl.CostEstimate(
        flops=6 * N * C * HW,
        transcendentals=N * G,
        bytes_accessed=2 * N * C * HW * bytes_per_elem + 2 * C * 4,
    )

    # TODO(synk): for very large groups (Cg*HW*4B >~ 8 MiB, e.g. huge feature
    # maps on v7x's 64 MiB VMEM) switch to a spatially tiled two-pass variant
    # (per-(n,g) stats kernel + tiled normalize kernel) instead of one block
    # per group.
    out = pl.pallas_call(
        kernel,
        out_shape=jax.ShapeDtypeStruct((N, G, Cg, HW), x.dtype),
        grid_spec=pltpu.PrefetchScalarGridSpec(
            num_scalar_prefetch=0,
            # N is the fastest-varying axis -> per-group weight/bias blocks
            # stay resident (same block index) across the inner batch loop.
            grid=(G, N),
            in_specs=[
                pl.BlockSpec((1, 1, Cg, HW), lambda g, n: (n, g, 0, 0)),
                pl.BlockSpec((1, 1, Cg, 1), lambda g, n: (0, g, 0, 0)),
                pl.BlockSpec((1, 1, Cg, 1), lambda g, n: (0, g, 0, 0)),
            ],
            out_specs=pl.BlockSpec((1, 1, Cg, HW), lambda g, n: (n, g, 0, 0)),
        ),
        compiler_params=pltpu.CompilerParams(
            dimension_semantics=("parallel", "parallel"),
            vmem_limit_bytes=64 * 1024 * 1024,
        ),
        cost_estimate=cost,
    )(x_r, w_r, b_r)

    return out.reshape(N, C, H, W)


def _reference(x, weight, bias, num_groups, eps=1e-5):
    # Pure-JAX reference mirroring the PyTorch forward (unbiased var).
    N, C, H, W = x.shape
    G = num_groups
    xg = x.reshape(N, G, -1).astype(jnp.float32)
    mean = xg.mean(-1, keepdims=True)
    var = jnp.sum((xg - mean) ** 2, axis=-1, keepdims=True) / (xg.shape[-1] - 1)
    xn = (xg - mean) / jnp.sqrt(var + eps)
    xn = xn.reshape(N, C, H, W)
    return (xn * weight + bias).astype(x.dtype)


if __name__ == "__main__":
    key = jax.random.PRNGKey(0)
    N, C, H, W = 2, 4, 16, 16
    num_groups = 2  # must divide C

    kx, kw, kb = jax.random.split(key, 3)
    x = jax.random.normal(kx, (N, C, H, W), dtype=jnp.float32)
    # Module initializes weight=1, bias=0; perturb so the fused affine path
    # is actually exercised by the check.
    weight = 1.0 + 0.1 * jax.random.normal(kw, (1, C, 1, 1), dtype=jnp.float32)
    bias = 0.1 * jax.random.normal(kb, (1, C, 1, 1), dtype=jnp.float32)

    out = group_norm_2d(x, weight, bias, num_groups)
    out = jax.block_until_ready(out)

    ref = _reference(x, weight, bias, num_groups)
    assert out.shape == (N, C, H, W)
    assert jnp.allclose(out, ref, atol=1e-5, rtol=1e-5)

    print("KERNEL_OK")
</pallas_src>

<mosaic_0001>
module attributes {stable_mosaic.version = 11 : i64} {
  func.func @_group_norm_kernel(%arg0: i32, %arg1: i32, %arg2: memref<1x1x2x256xf32, #tpu.memory_space<vmem>>, %arg3: memref<1x1x2x1xf32, #tpu.memory_space<vmem>>, %arg4: memref<1x1x2x1xf32, #tpu.memory_space<vmem>>, %arg5: memref<1x1x2x256xf32, #tpu.memory_space<vmem>>) attributes {dimension_semantics = [#tpu.dimension_semantics<parallel>, #tpu.dimension_semantics<parallel>], iteration_bounds = array<i64: 2, 2>, scalar_prefetch = 0 : i64, scratch_operands = 0 : i64, tpu.core_type = #tpu.core_type<tc>, window_params = [{transform_indices = @transform_0, window_bounds = array<i64: 1, 1, 2, 256>}, {transform_indices = @transform_1, window_bounds = array<i64: 1, 1, 2, 1>}, {transform_indices = @transform_2, window_bounds = array<i64: 1, 1, 2, 1>}, {transform_indices = @transform_3, window_bounds = array<i64: 1, 1, 2, 256>}]} {
    %c0 = arith.constant 0 : index
    %c0_0 = arith.constant 0 : index
    %c0_1 = arith.constant 0 : index
    %c0_2 = arith.constant 0 : index
    %0 = vector.load %arg2[%c0, %c0_0, %c0_1, %c0_2] : memref<1x1x2x256xf32, #tpu.memory_space<vmem>>, vector<1x1x2x256xf32>
    %1 = vector.shape_cast %0 : vector<1x1x2x256xf32> to vector<1x1x1x2x256xf32>
    %cst = arith.constant dense<0.000000e+00> : vector<1xf32>
    %2 = vector.multi_reduction <add>, %1, %cst [1, 2, 3, 4] : vector<1x1x1x2x256xf32> to vector<1xf32>
    %3 = vector.shape_cast %2 : vector<1xf32> to vector<1x1x1x1x1xf32>
    %4 = vector.extract %3[0, 0, 0, 0, 0] : f32 from vector<1x1x1x1x1xf32>
    %cst_3 = arith.constant 5.120000e+02 : f32
    %5 = arith.divf %4, %cst_3 : f32
    %6 = vector.broadcast %5 : f32 to vector<1x1x2x256xf32>
    %7 = arith.subf %0, %6 : vector<1x1x2x256xf32>
    %8 = arith.mulf %7, %7 : vector<1x1x2x256xf32>
    %9 = vector.shape_cast %8 : vector<1x1x2x256xf32> to vector<1x1x1x2x256xf32>
    %cst_4 = arith.constant dense<0.000000e+00> : vector<1xf32>
    %10 = vector.multi_reduction <add>, %9, %cst_4 [1, 2, 3, 4] : vector<1x1x1x2x256xf32> to vector<1xf32>
    %11 = vector.shape_cast %10 : vector<1xf32> to vector<1x1x1x1x1xf32>
    %12 = vector.extract %11[0, 0, 0, 0, 0] : f32 from vector<1x1x1x1x1xf32>
    %cst_5 = arith.constant 0.00195694715 : f32
    %13 = arith.mulf %12, %cst_5 : f32
    %cst_6 = arith.constant 9.99999974E-6 : f32
    %14 = arith.addf %13, %cst_6 : f32
    %15 = math.rsqrt %14 : f32
    %c0_7 = arith.constant 0 : index
    %c0_8 = arith.constant 0 : index
    %c0_9 = arith.constant 0 : index
    %c0_10 = arith.constant 0 : index
    %16 = vector.load %arg3[%c0_7, %c0_8, %c0_9, %c0_10] : memref<1x1x2x1xf32, #tpu.memory_space<vmem>>, vector<1x1x2x1xf32>
    %c0_11 = arith.constant 0 : index
    %c0_12 = arith.constant 0 : index
    %c0_13 = arith.constant 0 : index
    %c0_14 = arith.constant 0 : index
    %17 = vector.load %arg4[%c0_11, %c0_12, %c0_13, %c0_14] : memref<1x1x2x1xf32, #tpu.memory_space<vmem>>, vector<1x1x2x1xf32>
    %18 = vector.broadcast %15 : f32 to vector<1x1x2x1xf32>
    %19 = arith.mulf %16, %18 : vector<1x1x2x1xf32>
    %20 = vector.broadcast %5 : f32 to vector<1x1x2x1xf32>
    %21 = arith.mulf %20, %19 : vector<1x1x2x1xf32>
    %22 = arith.subf %17, %21 : vector<1x1x2x1xf32>
    %23 = vector.broadcast %19 : vector<1x1x2x1xf32> to vector<1x1x2x256xf32>
    %24 = arith.mulf %0, %23 : vector<1x1x2x256xf32>
    %25 = vector.broadcast %22 : vector<1x1x2x1xf32> to vector<1x1x2x256xf32>
    %26 = arith.addf %24, %25 : vector<1x1x2x256xf32>
    %c0_15 = arith.constant 0 : index
    %c0_16 = arith.constant 0 : index
    %c0_17 = arith.constant 0 : index
    %c0_18 = arith.constant 0 : index
    %27 = vector.load %arg5[%c0_15, %c0_16, %c0_17, %c0_18] : memref<1x1x2x256xf32, #tpu.memory_space<vmem>>, vector<1x1x2x256xf32>
    tpu.vector_store %arg5[%c0_15, %c0_16, %c0_17, %c0_18], %26 {strides = array<i32>} : memref<1x1x2x256xf32, #tpu.memory_space<vmem>>, vector<1x1x2x256xf32>,
    return
  }
  func.func @transform_0(%arg0: i32, %arg1: i32) -> (i32, i32, i32, i32) {
    %c0_i32 = arith.constant 0 : i32
    %c0_i32_0 = arith.constant 0 : i32
    %c0_i32_1 = arith.constant 0 : i32
    return %arg1, %arg0, %c0_i32, %c0_i32_0 : i32, i32, i32, i32
  }
  func.func @transform_1(%arg0: i32, %arg1: i32) -> (i32, i32, i32, i32) {
    %c0_i32 = arith.constant 0 : i32
    %c0_i32_0 = arith.constant 0 : i32
    %c0_i32_1 = arith.constant 0 : i32
    %c0_i32_2 = arith.constant 0 : i32
    return %c0_i32, %arg0, %c0_i32_0, %c0_i32_1 : i32, i32, i32, i32
  }
  func.func @transform_2(%arg0: i32, %arg1: i32) -> (i32, i32, i32, i32) {
    %c0_i32 = arith.constant 0 : i32
    %c0_i32_0 = arith.constant 0 : i32
    %c0_i32_1 = arith.constant 0 : i32
    %c0_i32_2 = arith.constant 0 : i32
    return %c0_i32, %arg0, %c0_i32_0, %c0_i32_1 : i32, i32, i32, i32
  }
  func.func @transform_3(%arg0: i32, %arg1: i32) -> (i32, i32, i32, i32) {
    %c0_i32 = arith.constant 0 : i32
    %c0_i32_0 = arith.constant 0 : i32
    %c0_i32_1 = arith.constant 0 : i32
    return %arg1, %arg0, %c0_i32, %c0_i32_0 : i32, i32, i32, i32
  }
}

</mosaic_0001>

<llo_original>
// kernel: tpu_custom_call.1
$region0: #{tpu_custom_call.1}
  #allocation0 [shape = 'u32[]', space=smem, size = 0x4, offset = 0x4, fixed_abs, tag = 'smem constant byte address 0x4 - core index']
  #allocation1 [shape = 'u32[144,128]{1,0:T(1,128)}', space=vmem, size = 0x12000, scoped, tag = 'internal scratch']
  %s0 = inlined_call_operand.hbm [shape: f32[2,2,2,256], index: 0, kind: input, shape index: {}]
  %s1 = inlined_call_operand.hbm [shape: f32[1,2,2,1], index: 1, kind: input, shape index: {}]
  %s2 = inlined_call_operand.hbm [shape: f32[1,2,2,1], index: 2, kind: input, shape index: {}]
  %s3 = inlined_call_operand.hbm [shape: f32[2,2,2,256], index: 3, kind: output, shape index: {}]
  %s4 = sld [smem:[#allocation0]]
  $region57: #{tpu_custom_call.1} parent=0
    _
  %s6 = ssub.s32 1, %s4
  %s7 = scalar_select 0, %s6, %s4
  $region1: #{tpu_custom_call.1} parent=0
    #allocation2 [shape = 'u8[4096]{0}', space=vmem, size = 0x1000, scoped, tag = 'input window, operand 0']
    #allocation3 [shape = 's32[2]{0}', space=sflag, size = 0x8, scoped, tag = 'scoped memory for tpu_custom_call.1']
    #allocation4 [shape = 's32[2]{0}', space=sflag, size = 0x8, scoped, tag = 'scoped memory for tpu_custom_call.1']
    #allocation5 [shape = 'u8[2048]{0}', space=vmem, size = 0x800, scoped, tag = 'input window, operand 1']
    #allocation6 [shape = 's32[2]{0}', space=sflag, size = 0x8, scoped, tag = 'scoped memory for tpu_custom_call.1']
    #allocation7 [shape = 'u8[2048]{0}', space=vmem, size = 0x800, scoped, tag = 'input window, operand 2']
    #allocation8 [shape = 'u8[4096]{0}', space=vmem, size = 0x1000, scoped, tag = 'output window, operand 0']
    %8 = vsyncpa [#allocation3], 0
    %s9 = scalar_lea.sflag [#allocation3], 1
    %10 = vsyncpa %s9, 0
    %11 = vsyncpa [#allocation6], 0
    %s12 = scalar_lea.sflag [#allocation6], 1
    %13 = vsyncpa %s12, 0
    %14 = vsyncpa [#allocation4], 0
    %s15 = scalar_lea.sflag [#allocation4], 1
    %16 = vsyncpa %s15, 0
    loop: start=0, step=1, limit=6
    $region2: #{tpu_custom_call.1} parent=1 // loop_pre_header
      _
    $region3: #{tpu_custom_call.1} parent=1 // loop_header
      %s18 = sphi 0, %s22
      %p19 = scmp.ge.s32.totalorder %s18, 6
      %s25 = sphi 0, %s37
      %s26 = sphi 0, %s33
      %s27 = sphi 0, %s25
      %s28 = sphi 0, %s26
      %s29 = sphi 0, %s27
      %s30 = sphi 0, %s28
      %s42 = sphi 0, %s44
      %s45 = sphi 0, %s42
      %s46 = sphi 0, %s45
      %s62 = sphi 0, %s46
      %s68 = sphi 0, %s70
      %s71 = sphi 0, %s68
      %s72 = sphi 0, %s71
      %s88 = sphi 0, %s72
      %s94 = sphi 0, %s96
      %s97 = sphi 0, %s94
      %s98 = sphi 0, %s97
      %s114 = sphi 0, %s98
      %s122 = sphi 0, %s124
      %s125 = sphi 0, %s122
      %s126 = sphi 0, %s125
      %s142 = sphi 0, %s126
    $region4: #{tpu_custom_call.1} parent=1 // loop_header_branch
      %21 = sbr.rel (%p19) target = $region8
    $region5: #{tpu_custom_call.1} parent=1 // loop_body
      %s23 = ssub.s32 %s18, 1
      %s24 = ssub.s32 %s18, 2
      %s31 = sadd.s32 1, %s26
      %p32 = scmp.ge.s32.totalorder %s31, 2
      %s33 = scalar_select %p32, 0, %s31
      %s34 = sadd.s32 1, %s25
      %s35 = scalar_select %p32, %s34, %s25
      %p36 = scmp.ge.s32.totalorder %s35, 2
      %s37 = scalar_select %p36, 0, %s35
      %s38 = ssub.s32 %s26, %s33
      %s39 = ssub.s32 %s25, %s37
      %s40 = sor.u32 %s38, %s39
      %p41 = scmp.eq.s32.totalorder %s40, 0
      %s43 = sadd.s32 %s42, 1
      %s44 = scalar_select %p41, %s42, %s43
      %p47 = pneg %p41
      %p48 = scmp.eq.s32.totalorder %s18, 3
      %p49 = por %p47, %p48
      %p50 = scmp.ne.s32.totalorder %s42, %s45
      %p51 = scmp.eq.s32.totalorder %s18, 0
      %p52 = por %p50, %p51
      %p53 = scmp.ne.s32.totalorder %s42, %s45
      %p54 = scmp.eq.s32.totalorder %s23, 3
      %p55 = por %p53, %p54
      %p56 = scmp.ne.s32.totalorder %s45, %s46
      %p57 = scmp.eq.s32.totalorder %s23, 0
      %p58 = por %p56, %p57
      %p59 = scmp.ne.s32.totalorder %s45, %s46
      %p60 = scmp.eq.s32.totalorder %s24, 3
      %p61 = por %p59, %p60
      %p63 = scmp.ne.s32.totalorder %s46, %s62
      %p64 = scmp.eq.s32.totalorder %s24, 0
      %p65 = por %p63, %p64
      %s66 = ssub.s32 %s25, %s37
      %p67 = scmp.eq.s32.totalorder %s66, 0
      %s69 = sadd.s32 %s68, 1
      %s70 = scalar_select %p67, %s68, %s69
      %p73 = pneg %p67
      %p74 = scmp.eq.s32.totalorder %s18, 3
      %p75 = por %p73, %p74
      %p76 = scmp.ne.s32.totalorder %s68, %s71
      %p77 = scmp.eq.s32.totalorder %s18, 0
      %p78 = por %p76, %p77
      %p79 = scmp.ne.s32.totalorder %s68, %s71
      %p80 = scmp.eq.s32.totalorder %s23, 3
      %p81 = por %p79, %p80
      %p82 = scmp.ne.s32.totalorder %s71, %s72
      %p83 = scmp.eq.s32.totalorder %s23, 0
      %p84 = por %p82, %p83
      %p85 = scmp.ne.s32.totalorder %s71, %s72
      %p86 = scmp.eq.s32.totalorder %s24, 3
      %p87 = por %p85, %p86
      %p89 = scmp.ne.s32.totalorder %s72, %s88
      %p90 = scmp.eq.s32.totalorder %s24, 0
      %p91 = por %p89, %p90
      %s92 = ssub.s32 %s25, %s37
      %p93 = scmp.eq.s32.totalorder %s92, 0
      %s95 = sadd.s32 %s94, 1
      %s96 = scalar_select %p93, %s94, %s95
      %p99 = pneg %p93
      %p100 = scmp.eq.s32.totalorder %s18, 3
      %p101 = por %p99, %p100
      %p102 = scmp.ne.s32.totalorder %s94, %s97
      %p103 = scmp.eq.s32.totalorder %s18, 0
      %p104 = por %p102, %p103
      %p105 = scmp.ne.s32.totalorder %s94, %s97
      %p106 = scmp.eq.s32.totalorder %s23, 3
      %p107 = por %p105, %p106
      %p108 = scmp.ne.s32.totalorder %s97, %s98
      %p109 = scmp.eq.s32.totalorder %s23, 0
      %p110 = por %p108, %p109
      %p111 = scmp.ne.s32.totalorder %s97, %s98
      %p112 = scmp.eq.s32.totalorder %s24, 3
      %p113 = por %p111, %p112
      %p115 = scmp.ne.s32.totalorder %s98, %s114
      %p116 = scmp.eq.s32.totalorder %s24, 0
      %p117 = por %p115, %p116
      %s118 = ssub.s32 %s26, %s33
      %s119 = ssub.s32 %s25, %s37
      %s120 = sor.u32 %s118, %s119
      %p121 = scmp.eq.s32.totalorder %s120, 0
      %s123 = sadd.s32 %s122, 1
      %s124 = scalar_select %p121, %s122, %s123
      %p127 = pneg %p121
      %p128 = scmp.eq.s32.totalorder %s18, 3
      %p129 = por %p127, %p128
      %p130 = scmp.ne.s32.totalorder %s122, %s125
      %p131 = scmp.eq.s32.totalorder %s18, 0
      %p132 = por %p130, %p131
      %p133 = scmp.ne.s32.totalorder %s122, %s125
      %p134 = scmp.eq.s32.totalorder %s23, 3
      %p135 = por %p133, %p134
      %p136 = scmp.ne.s32.totalorder %s125, %s126
      %p137 = scmp.eq.s32.totalorder %s23, 0
      %p138 = por %p136, %p137
      %p139 = scmp.ne.s32.totalorder %s125, %s126
      %p140 = scmp.eq.s32.totalorder %s24, 3
      %p141 = por %p139, %p140
      %p143 = scmp.ne.s32.totalorder %s126, %s142
      %p144 = scmp.eq.s32.totalorder %s24, 0
      %p145 = por %p143, %p144
      %p146 = scmp.le.s32.totalorder 1, %s18
      %p147 = scmp.lt.s32.totalorder %s18, 5
      %p148 = pnand %p146, %p147
      %p149 = pneg %p148
      // Predicated region
      $region9: #{tpu_custom_call.1} parent=5 // pred_check
        _
      $region10: #{tpu_custom_call.1} parent=5 // pred_check_branch
        %151 = sbr.rel (%p148) target = $region12
      $region11: #{tpu_custom_call.1} parent=5 // pred_region
        %s152 = ssub.s32 %s18, 1
      $region12: #{tpu_custom_call.1} parent=5 // pred_fallthru
        _
      %p153 = scmp.lt.s32.totalorder %s18, 4
      // Predicated region
      $region13: #{tpu_custom_call.1} parent=5 // pred_check
        %p154 = pneg %p153
      $region14: #{tpu_custom_call.1} parent=5 // pred_check_branch
        %156 = sbr.rel (%p154) target = $region16
      $region15: #{tpu_custom_call.1} parent=5 // pred_region
        // Predicated region
        $region17: #{tpu_custom_call.1} parent=15 // pred_check
          %p157 = pneg %p52
        $region18: #{tpu_custom_call.1} parent=15 // pred_check_branch
          %159 = sbr.rel (%p157) target = $region20
        $region19: #{tpu_custom_call.1} parent=15 // pred_region
          %s160 = sand.u32 %s42, 1
          %s161 = scalar_lea.sflag [#allocation3], %s160
          %s162 = sand.u32 %s42, 1
          %s163 = smul.addr %s162, 4
          %s164 = scalar_lea.vmem [#allocation2], %s163
          %s166 = ssub.s32 64, 64
          %167 = vsyncadd %s161, %s166
          %s168 = smul.addr %s25, 2
          %s169 = smul.addr %s26, 4
          %s170 = sadd.s32 %s168, %s169
          %s171 = smul.addr %s170, 32
          %s172 = scalar_lea.hbm %s0, %s171
          %s174 = sshll.u32 %s164, 4
          %s175 = int_to_ptr.vmem [resolvable:$true] %s174
          %177 = dma.hbm_to_vmem [thread:$0]  %s172, 64, %s175, %s161
        $region20: #{tpu_custom_call.1} parent=15 // pred_fallthru
          _
        // Predicated region
        $region21: #{tpu_custom_call.1} parent=15 // pred_check
          %p178 = pneg %p78
        $region22: #{tpu_custom_call.1} parent=15 // pred_check_branch
          %180 = sbr.rel (%p178) target = $region24
        $region23: #{tpu_custom_call.1} parent=15 // pred_region
          %s181 = sand.u32 %s18, 1
          %s182 = scalar_lea.sflag [#allocation6], %s181
          %s183 = sand.u32 %s68, 1
          %s184 = smul.addr %s183, 2
          %s185 = scalar_lea.vmem [#allocation5], %s184
          %s187 = ssub.s32 32, 32
          %188 = vsyncadd %s182, %s187
          %s189 = smul.addr %s25, 32
          %s190 = scalar_lea.hbm %s1, %s189
          %s192 = sshll.u32 %s185, 4
          %s193 = int_to_ptr.vmem [resolvable:$true] %s192
          %195 = dma.hbm_to_vmem [thread:$0]  %s190, 32, %s193, %s182
        $region24: #{tpu_custom_call.1} parent=15 // pred_fallthru
          _
        // Predicated region
        $region25: #{tpu_custom_call.1} parent=15 // pred_check
          %p196 = pneg %p104
        $region26: #{tpu_custom_call.1} parent=15 // pred_check_branch
          %198 = sbr.rel (%p196) target = $region28
        $region27: #{tpu_custom_call.1} parent=15 // pred_region
          %s199 = sand.u32 %s18, 1
          %s200 = scalar_lea.sflag [#allocation6], %s199
          %s201 = sand.u32 %s94, 1
          %s202 = smul.addr %s201, 2
          %s203 = scalar_lea.vmem [#allocation7], %s202
          %s205 = ssub.s32 32, 32
          %206 = vsyncadd %s200, %s205
          %s207 = smul.addr %s25, 32
          %s208 = scalar_lea.hbm %s2, %s207
          %s210 = sshll.u32 %s203, 4
          %s211 = int_to_ptr.vmem [resolvable:$true] %s210
          %213 = dma.hbm_to_vmem [thread:$0]  %s208, 32, %s211, %s200
        $region28: #{tpu_custom_call.1} parent=15 // pred_fallthru
          _
      $region16: #{tpu_custom_call.1} parent=5 // pred_fallthru
        _
      %p214 = scmp.le.s32.totalorder 1, %s18
      %p215 = scmp.lt.s32.totalorder %s18, 5
      %p216 = pnand %p214, %p215
      %p217 = pneg %p216
      // Predicated region
      $region29: #{tpu_custom_call.1} parent=5 // pred_check
        _
      $region30: #{tpu_custom_call.1} parent=5 // pred_check_branch
        %219 = sbr.rel (%p216) target = $region32
      $region31: #{tpu_custom_call.1} parent=5 // pred_region
        %s220 = ssub.s32 %s18, 1
        %s221 = sand.u32 %s45, 1
        %s222 = scalar_lea.sflag [#allocation3], %s221
        %s223 = sand.u32 %s45, 1
        %s224 = smul.addr %s223, 4
        %s225 = scalar_lea.vmem [#allocation2], %s224
        // Predicated region
        $region33: #{tpu_custom_call.1} parent=31 // pred_check
          %p226 = pneg %p58
        $region34: #{tpu_custom_call.1} parent=31 // pred_check_branch
          %228 = sbr.rel (%p226) target = $region36
        $region35: #{tpu_custom_call.1} parent=31 // pred_region
          %229 = dma.done %s222, 64
        $region36: #{tpu_custom_call.1} parent=31 // pred_fallthru
          _
        %s230 = sand.u32 %s23, 1
        %s231 = scalar_lea.sflag [#allocation6], %s230
        %s232 = sand.u32 %s71, 1
        %s233 = smul.addr %s232, 2
        %s234 = scalar_lea.vmem [#allocation5], %s233
        // Predicated region
        $region37: #{tpu_custom_call.1} parent=31 // pred_check
          %p235 = pneg %p84
        $region38: #{tpu_custom_call.1} parent=31 // pred_check_branch
          %237 = sbr.rel (%p235) target = $region40
        $region39: #{tpu_custom_call.1} parent=31 // pred_region
          %238 = dma.done %s231, 32
        $region40: #{tpu_custom_call.1} parent=31 // pred_fallthru
          _
        %s239 = sand.u32 %s23, 1
        %s240 = scalar_lea.sflag [#allocation6], %s239
        %s241 = sand.u32 %s97, 1
        %s242 = smul.addr %s241, 2
        %s243 = scalar_lea.vmem [#allocation7], %s242
        // Predicated region
        $region41: #{tpu_custom_call.1} parent=31 // pred_check
          %p244 = pneg %p110
        $region42: #{tpu_custom_call.1} parent=31 // pred_check_branch
          %246 = sbr.rel (%p244) target = $region44
        $region43: #{tpu_custom_call.1} parent=31 // pred_region
          %247 = dma.done %s240, 32
        $region44: #{tpu_custom_call.1} parent=31 // pred_fallthru
          _
        %s248 = sand.u32 %s45, 1
        %s249 = scalar_lea.sflag [#allocation3], %s248
        %s250 = sand.u32 %s45, 1
        %s251 = smul.addr %s250, 4
        %s252 = scalar_lea.vmem [#allocation2], %s251
        %p253 = pneg %p58
        %p254 = pneg %p55
        %s255 = sand.u32 %s23, 1
        %s256 = scalar_lea.sflag [#allocation6], %s255
        %s257 = sand.u32 %s71, 1
        %s258 = smul.addr %s257, 2
        %s259 = scalar_lea.vmem [#allocation5], %s258
        %p260 = pneg %p84
        %p261 = pneg %p81
        %s262 = sand.u32 %s23, 1
        %s263 = scalar_lea.sflag [#allocation6], %s262
        %s264 = sand.u32 %s97, 1
        %s265 = smul.addr %s264, 2
        %s266 = scalar_lea.vmem [#allocation7], %s265
        %p267 = pneg %p110
        %p268 = pneg %p107
        %p269 = pneg %p138
        %p270 = pneg %p135
        %s271 = sand.u32 %s125, 1
        %s272 = scalar_lea.sflag [#allocation4], %s271
        %s273 = sand.u32 %s125, 1
        %s274 = smul.addr %s273, 4
        %s275 = scalar_lea.vmem [#allocation8], %s274
        %v276 = vld [vmem:[%s225] sm:$0xf]
        %v279 = vunpack.c.l.s4 1983009808
        %v280 = vunpack.c.0.s8 %v279
        %v281 = vlaneseq
        %v282 = vshrl.u32 %v281, 7
        %v283 = vsub.s32 %v280, %v282
        %v284 = vrot.slane %v276, %v283
        %v285 = vcombine.high %v284, %v284
        %vm288 = vcmask 1041408
        %v289 = vsel %vm288, %v284, 0.0
        %v290 = vsel %vm288, %v285, 0.0
        %v291 = vadd.f32 %v289, %v290
        %292 = vadd.xlane.f32.xlu0 %v291
        %v293 = vpop.xlane.xlu0 %292
        %v294 = vrot.slane %v293, 4
        %v295 = vadd.f32 %v293, %v294
        %v296 = vrot.slane %v295, 2
        %v297 = vadd.f32 %v295, %v296
        %v298 = vrot.slane %v297, 1
        %v299 = vadd.f32 %v297, %v298
        %s300 = vtos %v299
        %v301 = vrcp.pop 512.0
        %s302 = vtos %v301
        %s303 = smul.f32 %s300, %s302
        %v304 = vstv %s303
        %v305 = vsub.f32 %v276, %v304
        %v306 = vmul.f32 %v305, %v305
        %v309 = vunpack.c.l.s4 1983009808
        %v310 = vunpack.c.0.s8 %v309
        %v311 = vlaneseq
        %v312 = vshrl.u32 %v311, 7
        %v313 = vsub.s32 %v310, %v312
        %v314 = vrot.slane %v306, %v313
        %v315 = vcombine.high %v314, %v314
        %v318 = vsel %vm288, %v314, 0.0
        %v319 = vsel %vm288, %v315, 0.0
        %v320 = vadd.f32 %v318, %v319
        %321 = vadd.xlane.f32.xlu0 %v320
        %v322 = vpop.xlane.xlu0 %321
        %v323 = vrot.slane %v322, 4
        %v324 = vadd.f32 %v322, %v323
        %v325 = vrot.slane %v324, 2
        %v326 = vadd.f32 %v324, %v325
        %v327 = vrot.slane %v326, 1
        %v328 = vadd.f32 %v326, %v327
        %s329 = vtos %v328
        %s330 = smul.f32 %s329, 0.0019569471
        %s331 = sadd.f32 %s330, 1e-05
        %v332 = vstv %s331
        %v333 = vrsqrt.pop %v332
        %s334 = vtos %v333
        %v335 = vld [vmem:[%s234] sm:$0x3]
        %v336 = vld [vmem:[%s243] sm:$0x3]
        %v337 = vstv %s334
        %v338 = vmul.f32 %v335, %v337
        %v339 = vmul.f32 %v304, %v338
        %v340 = vsub.f32 %v336, %v339
        %342 = vset.pattern.permute.xlu0 0
        %343 = vperm.xlu0 %342, %v338
        %v344 = vpop.permute.xlu0 %343
        %v346 = vunpack.c.l.s4 269488144
        %v347 = vunpack.c.0.s8 %v346
        %v348 = vlaneseq
        %v349 = vshrl.u32 %v348, 7
        %v350 = vsub.s32 %v347, %v349
        %v351 = vrot.slane %v344, %v350
        %v353 = vmul.f32 %v276, %v351
        %355 = vset.pattern.permute.xlu0 0
        %356 = vperm.xlu0 %355, %v340
        %v357 = vpop.permute.xlu0 %356
        %v359 = vunpack.c.l.s4 269488144
        %v360 = vunpack.c.0.s8 %v359
        %v361 = vlaneseq
        %v362 = vshrl.u32 %v361, 7
        %v363 = vsub.s32 %v360, %v362
        %v364 = vrot.slane %v357, %v363
        %v366 = vadd.f32 %v353, %v364
        %367 = vst [vmem:[%s275] sm:$0xf] %v366
        %s368 = sand.u32 %s125, 1
        %s369 = scalar_lea.sflag [#allocation4], %s368
        %s370 = sand.u32 %s125, 1
        %s371 = smul.addr %s370, 4
        %s372 = scalar_lea.vmem [#allocation8], %s371
        // Predicated region
        $region45: #{tpu_custom_call.1} parent=31 // pred_check
          %p373 = pneg %p135
        $region46: #{tpu_custom_call.1} parent=31 // pred_check_branch
          %375 = sbr.rel (%p373) target = $region48
        $region47: #{tpu_custom_call.1} parent=31 // pred_region
          %s377 = ssub.s32 64, 64
          %378 = vsyncadd %s369, %s377
          %s379 = smul.addr %s27, 2
          %s380 = smul.addr %s28, 4
          %s381 = sadd.s32 %s379, %s380
          %s382 = smul.addr %s381, 32
          %s383 = scalar_lea.hbm %s3, %s382
          %s385 = sshll.u32 %s372, 4
          %s386 = int_to_ptr.vmem [resolvable:$true] %s385
          %388 = dma.vmem_to_hbm [thread:$0]  %s386, 64, %s383, %s369
        $region48: #{tpu_custom_call.1} parent=31 // pred_fallthru
          _
      $region32: #{tpu_custom_call.1} parent=5 // pred_fallthru
        _
      %p389 = scmp.le.s32.totalorder 2, %s18
      // Predicated region
      $region49: #{tpu_custom_call.1} parent=5 // pred_check
        %p390 = pneg %p389
      $region50: #{tpu_custom_call.1} parent=5 // pred_check_branch
        %392 = sbr.rel (%p390) target = $region52
      $region51: #{tpu_custom_call.1} parent=5 // pred_region
        %s393 = ssub.s32 %s18, 2
        // Predicated region
        $region53: #{tpu_custom_call.1} parent=51 // pred_check
          %p394 = pneg %p141
        $region54: #{tpu_custom_call.1} parent=51 // pred_check_branch
          %396 = sbr.rel (%p394) target = $region56
        $region55: #{tpu_custom_call.1} parent=51 // pred_region
          %s397 = sand.u32 %s126, 1
          %s398 = scalar_lea.sflag [#allocation4], %s397
          %s399 = sand.u32 %s126, 1
          %s400 = smul.addr %s399, 4
          %s401 = scalar_lea.vmem [#allocation8], %s400
          %402 = dma.done %s398, 64
        $region56: #{tpu_custom_call.1} parent=51 // pred_fallthru
          _
      $region52: #{tpu_custom_call.1} parent=5 // pred_fallthru
        _
    $region6: #{tpu_custom_call.1} parent=1 // loop_footer
      %s22 = sadd.s32 1, %s18
    $region7: #{tpu_custom_call.1} parent=1 // loop_footer_branch
      %17 = sbr.rel target = $region3
    $region8: #{tpu_custom_call.1} parent=1 // loop_exit
      _
    %403 = vsyncpa [#allocation3], 1
    %s404 = scalar_lea.sflag [#allocation3], 1
    %405 = vsyncpa %s404, 1
    %406 = vsyncpa [#allocation6], 1
    %s407 = scalar_lea.sflag [#allocation6], 1
    %408 = vsyncpa %s407, 1
    %409 = vsyncpa [#allocation4], 1
    %s410 = scalar_lea.sflag [#allocation4], 1
    %411 = vsyncpa %s410, 1

</llo_original>
